<compile_context>
chip_gen: v7x
topology: tpu7x:2x2x1
jax: 0.10.0
libtpu: 0.0.40
codegen_flags: <defaults>
</compile_context>

<pallas_src>
import jax
import jax.numpy as jnp
import numpy as np
from jax.experimental import pallas as pl
from jax.experimental.pallas import tpu as pltpu

_LANES = 128


def _round_up(x, m):
    return ((x + m - 1) // m) * m


def _structural_tensor_kernel(l_ref, o_ref):
    # l_ref: (3, T)  o_ref: (9, T)   -- T = lane tile (multiple of 128)
    l = l_ref[...]                                   # (3, T)
    for j in range(3):
        # rows [3j, 3j+3): out[3j + k, :] = l[j, :] * l[k, :]
        o_ref[3 * j:3 * j + 3, :] = l * l[j:j + 1, :]


def structural_tensor_computer(l_, tile=1024):
    """l_: (B, N, 3) float32 -> (B, N+1, 3, 3) float32"""
    B, N, D = l_.shape
    assert D == 3, "last dim must be 3"
    M = B * N

    # ---- lane-dense view: (3, M), padded so the tile evenly divides ----
    tile = _round_up(min(tile, _round_up(max(M, 1), _LANES)), _LANES)
    Mp = _round_up(max(M, 1), tile)
    lt = l_.reshape(M, 3).T                          # (3, M)  layout plumbing
    if Mp != M:
        lt = jnp.pad(lt, ((0, 0), (0, Mp - M)))      # zero padding -> 0*0 junk

    grid = (Mp // tile,)
    out_lane = pl.pallas_call(
        _structural_tensor_kernel,
        out_shape=jax.ShapeDtypeStruct((9, Mp), l_.dtype),
        grid_spec=pltpu.PrefetchScalarGridSpec(
            num_scalar_prefetch=0,
            grid=grid,
            in_specs=[pl.BlockSpec((3, tile), lambda i: (0, i))],
            out_specs=pl.BlockSpec((9, tile), lambda i: (0, i)),
        ),
        compiler_params=pltpu.CompilerParams(
            dimension_semantics=("parallel",),
        ),
        cost_estimate=pl.CostEstimate(
            flops=9 * Mp,
            transcendentals=0,
            bytes_accessed=(3 + 9) * 4 * Mp,
        ),
    )(lt)

    # ---- back to PyTorch layout; append the constant eye(3)/3 block ----
    outer = out_lane[:, :M].T.reshape(B, N, 3, 3)    # [b,n,j,k] = l[b,n,j]*l[b,n,k]
    eye = jnp.broadcast_to(
        (jnp.eye(3, dtype=l_.dtype) / 3.0)[None, None], (B, 1, 3, 3)
    )
    return jnp.concatenate([outer, eye], axis=1)     # (B, N+1, 3, 3)


def _reference(l_):
    # pure-JAX reference matching the PyTorch module
    outer = jnp.einsum("bni,bnj->bnij", l_, l_)               # (B, N, 3, 3)
    eye = (jnp.eye(3, dtype=l_.dtype) / 3.0)[None, None]       # (1, 1, 3, 3)
    eye = jnp.broadcast_to(eye, (l_.shape[0], 1, 3, 3))
    return jnp.concatenate([outer, eye], axis=1)               # (B, N+1, 3, 3)


if __name__ == "__main__":
    key = jax.random.PRNGKey(0)
    B, N = 2, 8
    l_ = jax.random.normal(key, (B, N, 3), dtype=jnp.float32)

    out = structural_tensor_computer(l_)
    out = jax.block_until_ready(out)

    ref = _reference(l_)
    np.testing.assert_allclose(np.asarray(out), np.asarray(ref), rtol=1e-6, atol=1e-6)

    print("KERNEL_OK")
</pallas_src>

<mosaic_0001>
module attributes {stable_mosaic.version = 11 : i64} {
  func.func @_structural_tensor_kernel(%arg0: i32, %arg1: memref<3x128xf32, #tpu.memory_space<vmem>>, %arg2: memref<9x128xf32, #tpu.memory_space<vmem>>) attributes {dimension_semantics = [#tpu.dimension_semantics<parallel>], iteration_bounds = array<i64: 1>, scalar_prefetch = 0 : i64, scratch_operands = 0 : i64, tpu.core_type = #tpu.core_type<tc>, window_params = [{transform_indices = @transform_0, window_bounds = array<i64: 3, 128>}, {transform_indices = @transform_1, window_bounds = array<i64: 9, 128>}]} {
    %c0 = arith.constant 0 : index
    %c0_0 = arith.constant 0 : index
    %0 = vector.load %arg1[%c0, %c0_0] : memref<3x128xf32, #tpu.memory_space<vmem>>, vector<3x128xf32>
    %1 = vector.extract_strided_slice %0 {offsets = [0, 0], sizes = [1, 128], strides = [1, 1]} : vector<3x128xf32> to vector<1x128xf32>
    %2 = vector.broadcast %1 : vector<1x128xf32> to vector<3x128xf32>
    %3 = arith.mulf %0, %2 : vector<3x128xf32>
    %c0_1 = arith.constant 0 : index
    %c0_2 = arith.constant 0 : index
    %4 = vector.load %arg2[%c0_1, %c0_2] : memref<9x128xf32, #tpu.memory_space<vmem>>, vector<3x128xf32>
    tpu.vector_store %arg2[%c0_1, %c0_2], %3 {strides = array<i32>} : memref<9x128xf32, #tpu.memory_space<vmem>>, vector<3x128xf32>,
    %5 = vector.extract_strided_slice %0 {offsets = [1, 0], sizes = [1, 128], strides = [1, 1]} : vector<3x128xf32> to vector<1x128xf32>
    %6 = vector.broadcast %5 : vector<1x128xf32> to vector<3x128xf32>
    %7 = arith.mulf %0, %6 : vector<3x128xf32>
    %c3 = arith.constant 3 : index
    %c0_3 = arith.constant 0 : index
    %8 = vector.load %arg2[%c3, %c0_3] : memref<9x128xf32, #tpu.memory_space<vmem>>, vector<3x128xf32>
    tpu.vector_store %arg2[%c3, %c0_3], %7 {strides = array<i32>} : memref<9x128xf32, #tpu.memory_space<vmem>>, vector<3x128xf32>,
    %9 = vector.extract_strided_slice %0 {offsets = [2, 0], sizes = [1, 128], strides = [1, 1]} : vector<3x128xf32> to vector<1x128xf32>
    %10 = vector.broadcast %9 : vector<1x128xf32> to vector<3x128xf32>
    %11 = arith.mulf %0, %10 : vector<3x128xf32>
    %c6 = arith.constant 6 : index
    %c0_4 = arith.constant 0 : index
    %12 = vector.load %arg2[%c6, %c0_4] : memref<9x128xf32, #tpu.memory_space<vmem>>, vector<3x128xf32>
    tpu.vector_store %arg2[%c6, %c0_4], %11 {strides = array<i32>} : memref<9x128xf32, #tpu.memory_space<vmem>>, vector<3x128xf32>,
    return
  }
  func.func @transform_0(%arg0: i32) -> (i32, i32) {
    %c0_i32 = arith.constant 0 : i32
    %c0_i32_0 = arith.constant 0 : i32
    return %c0_i32, %arg0 : i32, i32
  }
  func.func @transform_1(%arg0: i32) -> (i32, i32) {
    %c0_i32 = arith.constant 0 : i32
    %c0_i32_0 = arith.constant 0 : i32
    return %c0_i32, %arg0 : i32, i32
  }
}

</mosaic_0001>

<llo_original>
// kernel: tpu_custom_call.1
$region0: #{tpu_custom_call.1}
  #allocation0 [shape = 'u32[]', space=smem, size = 0x4, offset = 0x4, fixed_abs, tag = 'smem constant byte address 0x4 - core index']
  #allocation1 [shape = 'u32[144,128]{1,0:T(1,128)}', space=vmem, size = 0x12000, scoped, tag = 'internal scratch']
  %s0 = inlined_call_operand.hbm [shape: f32[3,128], index: 0, kind: input, shape index: {}]
  %s1 = inlined_call_operand.hbm [shape: f32[9,128], index: 1, kind: output, shape index: {}]
  %s2 = sld [smem:[#allocation0]]
  $region18: #{tpu_custom_call.1} parent=0
    _
  %s4 = ssub.s32 1, %s2
  %s5 = scalar_select 0, %s4, %s2
  $region1: #{tpu_custom_call.1} parent=0
    #allocation2 [shape = 'u8[2048]{0}', space=vmem, size = 0x800, scoped, tag = 'input window, operand 0, single buffered']
    #allocation3 [shape = 's32[1]{0}', space=sflag, size = 0x4, scoped, tag = 'scoped memory for tpu_custom_call.1']
    #allocation4 [shape = 's32[1]{0}', space=sflag, size = 0x4, scoped, tag = 'scoped memory for tpu_custom_call.1']
    #allocation5 [shape = 'u8[8192]{0}', space=vmem, size = 0x2000, scoped, tag = 'output window, operand 0, single buffered']
    %6 = vsyncpa [#allocation3], 0
    %7 = vsyncpa [#allocation4], 0
    // Predicated region
    $region2: #{tpu_custom_call.1} parent=1 // pred_check
      _
    $region3: #{tpu_custom_call.1} parent=1 // pred_check_branch
      %9 = sbr.rel (0) target = $region5
    $region4: #{tpu_custom_call.1} parent=1 // pred_region
      %s11 = ssub.s32 64, 64
      %12 = vsyncadd [#allocation3], %s11
      %s14 = sshll.u32 [#allocation2], 4
      %s15 = int_to_ptr.vmem [resolvable:$true] %s14
      %17 = dma.hbm_to_vmem [thread:$0]  %s0, 64, %s15, [#allocation3]
    $region5: #{tpu_custom_call.1} parent=1 // pred_fallthru
      _
    // Predicated region
    $region6: #{tpu_custom_call.1} parent=1 // pred_check
      _
    $region7: #{tpu_custom_call.1} parent=1 // pred_check_branch
      %19 = sbr.rel (0) target = $region9
    $region8: #{tpu_custom_call.1} parent=1 // pred_region
      %20 = dma.done [#allocation3], 64
    $region9: #{tpu_custom_call.1} parent=1 // pred_fallthru
      _
    %v21 = vld [vmem:[#allocation2] sm:$0x7]
    %v22 = vlaneseq
    %v23 = vshrl.u32 %v22, 7
    %v24 = vsub.s32 0, %v23
    %v25 = vrot.slane %v21, %v24
    %v26 = vmul.f32 %v21, %v25
    %27 = vst [vmem:[#allocation5] sm:$0x7] %v26
    %v28 = vlaneseq
    %v29 = vshrl.u32 %v28, 7
    %v30 = vsub.s32 1, %v29
    %v31 = vrot.slane %v21, %v30
    %v32 = vmul.f32 %v21, %v31
    %33 = vst [vmem:[#allocation5 + $0x3] sm:$0x7] %v32
    %v34 = vlaneseq
    %v35 = vshrl.u32 %v34, 7
    %v36 = vsub.s32 2, %v35
    %v37 = vrot.slane %v21, %v36
    %v38 = vmul.f32 %v21, %v37
    %39 = vst [vmem:[#allocation5 + $0x6] sm:$0x7] %v38
    // Predicated region
    $region10: #{tpu_custom_call.1} parent=1 // pred_check
      _
    $region11: #{tpu_custom_call.1} parent=1 // pred_check_branch
      %41 = sbr.rel (0) target = $region13
    $region12: #{tpu_custom_call.1} parent=1 // pred_region
      %s43 = ssub.s32 256, 256
      %44 = vsyncadd [#allocation4], %s43
      %s45 = sshll.u32 [#allocation5], 4
      %s46 = int_to_ptr.vmem [resolvable:$true] %s45
      %51 = dma.vmem_to_hbm [thread:$0]  %s46, 256, %s1, [#allocation4], 128, 128, 8
    $region13: #{tpu_custom_call.1} parent=1 // pred_fallthru
      _
    // Predicated region
    $region14: #{tpu_custom_call.1} parent=1 // pred_check
      _
    $region15: #{tpu_custom_call.1} parent=1 // pred_check_branch
      %53 = sbr.rel (0) target = $region17
    $region16: #{tpu_custom_call.1} parent=1 // pred_region
      %54 = dma.done [#allocation4], 256
    $region17: #{tpu_custom_call.1} parent=1 // pred_fallthru
      _
    %55 = vsyncpa [#allocation3], 1
    %56 = vsyncpa [#allocation4], 1

</llo_original>
